<compile_context>
chip_gen: v7x
topology: tpu7x:2x2x1
jax: 0.10.0
libtpu: 0.0.40
codegen_flags: <defaults>
</compile_context>

<pallas_src>
import jax
import jax.numpy as jnp
from jax.experimental import pallas as pl
from jax.experimental.pallas import tpu as pltpu

# ---- static configuration (matches the constructor arguments above) ----
C_IN = 4          # in_channels
C_OUT = 8         # out_channels
KT = 3            # kernel_size[0]  (temporal, odd)
K = 2             # kernel_size[1]  (graph kernel size == A.shape[0])
PAD = (KT - 1) // 2
BN_EPS = 1e-5
N, T, V = 2, 16, 16
NT = N * T        # 32  rows of every tile
VC = V * C_OUT    # 128 lane-dense width
VCI = V * C_IN    # 64


def st_gcn_kernel(x3_ref, w_ref, c_ref, o_ref):
    """Whole (batch-merged) st_gcn forward.

    x3_ref : (NT, 3*V*C_IN)  = [x_{t-1} | x | x_{t+1}]  (boundary rows zeroed)
    w_ref  : (3*V*C_IN, 2*VC) fully folded weight; first VC cols -> pre-LeakyReLU
             activation u, last VC cols -> residual branch (nonzero only for the
             center x block).
    c_ref  : (40, VC) constants: rows 0..NT-1 row constant of u, row NT = BN2
             scale, row NT+1 = BN2 shift + residual constant.
    """
    f32 = jnp.float32

    # ONE MXU op for the whole pre-activation + residual linear part
    y = jnp.dot(x3_ref[...], w_ref[...], preferred_element_type=f32)   # (NT, 2*VC)

    u = y[:, :VC] + c_ref[:NT, :]                   # pre-LeakyReLU (bias/BN1/pad folded)
    u = jnp.where(u > 0, u, 0.2 * u)                # LeakyReLU(0.2)

    # BN2 (eval) with residual bias folded into the shift, plus residual linear part
    out = u * c_ref[NT:NT + 1, :] + c_ref[NT + 1:NT + 2, :] + y[:, VC:]
    o_ref[...] = jnp.maximum(out, 0.0).astype(o_ref.dtype)   # final ReLU


def pack_operands(A, params):
    """One-time, offline weight folding (call ONCE, reuse across forwards).

    Folds: gcn 1x1 conv -> A contraction -> BN1 -> temporal conv into per-dt
    weights W_dt; residual conv + BN into Wr; all biases / BN shifts (with the
    zero-pad boundary handling) into a (NT, VC) row constant.
    """
    (w1, b1, s1, h1, wt, bt, s2, h2, wr, sr, hr) = params
    f32 = jnp.float32
    Af = A.astype(f32)
    s1f = s1.reshape(-1)
    srf = sr.reshape(-1)

    # z = x @ Wz + cz   (gcn conv + bias, A aggregation, BN1 -- all affine in x)
    #   Wz[(v,i),(w,c)] = s1[c] * sum_k w1[k,i,c] * A[k,v,w]
    Wz = jnp.einsum('kic,kvw->viwc', w1, Af) * s1f[None, None, None, :]
    Wz = Wz.reshape(VCI, VC)
    #   cz[(w,c)] = s1[c] * sum_k b1[k,c] * (sum_v A[k,v,w]) + h1[c]
    b1f = b1.reshape(K, C_OUT)
    cz = jnp.einsum('kc,kw->wc', b1f, Af.sum(axis=1)) * s1f[None, :] \
        + h1.reshape(1, C_OUT)                                      # (V, C_OUT)

    # temporal conv folded through Wz:  W_dt[(v,i),(w,e)] = sum_c Wz[..,(w,c)] wt[dt,c,e]
    Wz4 = Wz.reshape(VCI, V, C_OUT)
    Wdt = jnp.einsum('xwc,dce->dxwe', Wz4, wt).reshape(KT, VCI, VC)

    # residual 1x1 conv with BN scale folded: Wr[(v,i),(w,c)] = delta(v,w) wr[i,c] sr[c]
    Wr = jnp.einsum('vu,ic->viuc', jnp.eye(V, dtype=f32), wr * srf[None, :])
    Wr = Wr.reshape(VCI, VC)

    # single folded weight: rows = [x_{t-1} | x | x_{t+1}] blocks, cols = [u | res]
    zero = jnp.zeros((VCI, VC), f32)
    wbig = jnp.concatenate([
        jnp.concatenate([Wdt[0], zero], axis=1),
        jnp.concatenate([Wdt[1], Wr],   axis=1),
        jnp.concatenate([Wdt[2], zero], axis=1)], axis=0)           # (3*VCI, 2*VC)

    # row constant of u: bt + cz propagated through the valid temporal taps at each t
    cvec = jnp.einsum('wc,dce->dwe', cz, wt).reshape(KT, VC)
    t_of = jnp.arange(NT) % T
    const_u = (jnp.tile(bt.reshape(-1), V)[None, :]
               + cvec[1][None, :]
               + (t_of != 0).astype(f32)[:, None] * cvec[0][None, :]
               + (t_of != T - 1).astype(f32)[:, None] * cvec[2][None, :])   # (NT, VC)

    tile_v = lambda p: jnp.tile(p.reshape(-1), V).reshape(1, VC)
    s2_t = tile_v(s2)
    h2r_t = tile_v(h2) + tile_v(hr)       # residual constant folded into BN2 shift

    consts = jnp.concatenate(
        [const_u, s2_t, h2r_t, jnp.zeros((6, VC), f32)], axis=0)    # (40, VC)

    return wbig, consts


def _prepare_x(x_nchw):
    """(N, C_in, T, V) -> lane-dense (N*T, 3*V*C_IN) slab [x_{t-1} | x | x_{t+1}]
    with rows at sample/time boundaries zeroed (matches the Conv2d zero pad)."""
    n, cin, t, v = x_nchw.shape
    x_d = jnp.transpose(x_nchw, (0, 2, 3, 1)).reshape(n * t, v * cin).astype(jnp.float32)
    t_of = jnp.arange(n * t) % t
    xp = jnp.where((t_of == 0)[:, None], 0.0, jnp.roll(x_d, 1, axis=0))
    xn = jnp.where((t_of == t - 1)[:, None], 0.0, jnp.roll(x_d, -1, axis=0))
    return jnp.concatenate([xp, x_d, xn], axis=1)


@jax.jit
def st_gcn_forward(x_nchw, A, wbig, consts):
    """x_nchw: (N, C_in, T, V) (PyTorch layout). wbig/consts from pack_operands
    (built once, outside the per-call path). Returns ((N, T, V, C_out), A)."""
    n, cin, t, v = x_nchw.shape
    x3 = _prepare_x(x_nchw)

    full = lambda arr: pl.BlockSpec(arr.shape, lambda i: (0, 0))

    out = pl.pallas_call(
        st_gcn_kernel,
        out_shape=jax.ShapeDtypeStruct((n * t, v * C_OUT), jnp.float32),
        grid_spec=pltpu.PrefetchScalarGridSpec(
            num_scalar_prefetch=0,
            grid=(1,),   # batch merged into one invocation (single-TC guidance)
            in_specs=[full(x3), full(wbig), full(consts)],
            out_specs=pl.BlockSpec((n * t, v * C_OUT), lambda i: (0, 0)),
        ),
        compiler_params=pltpu.CompilerParams(dimension_semantics=("arbitrary",)),
    )(x3, wbig, consts)

    return out.reshape(n, t, v, C_OUT), A


def bn_fold(gamma, beta, mean, var):
    scale = gamma / jnp.sqrt(var + BN_EPS)
    shift = beta - mean * scale
    return scale, shift


def init_params(key):
    ks = jax.random.split(key, 20)
    nrm = lambda k, shape, s=0.2: s * jax.random.normal(k, shape, jnp.float32)

    # gcn conv: torch weight (K*Cout, Cin, 1, 1) with kc = k*Cout + c  ->  w1[k, ci, c]
    w1 = nrm(ks[0], (K, C_IN, C_OUT))
    b1 = nrm(ks[1], (K, 1, C_OUT), 0.1)

    # BN1
    g1 = 1.0 + nrm(ks[2], (C_OUT,), 0.1)
    be1 = nrm(ks[3], (C_OUT,), 0.1)
    m1 = nrm(ks[4], (C_OUT,), 0.1)
    v1 = 0.5 + jax.random.uniform(ks[5], (C_OUT,), jnp.float32)
    s1, h1 = bn_fold(g1, be1, m1, v1)

    # temporal conv: torch weight (Cout, Cout, Kt, 1) -> wt[dt, ci, co]
    wt = nrm(ks[6], (KT, C_OUT, C_OUT))
    bt = nrm(ks[7], (1, C_OUT), 0.1)

    # BN2
    g2 = 1.0 + nrm(ks[8], (C_OUT,), 0.1)
    be2 = nrm(ks[9], (C_OUT,), 0.1)
    m2 = nrm(ks[10], (C_OUT,), 0.1)
    v2 = 0.5 + jax.random.uniform(ks[11], (C_OUT,), jnp.float32)
    s2, h2 = bn_fold(g2, be2, m2, v2)

    # residual: torch Conv2d(Cin, Cout, 1) weight (Cout, Cin, 1, 1) -> wr[ci, co], bias br
    wr = nrm(ks[12], (C_IN, C_OUT))
    br = nrm(ks[13], (C_OUT,), 0.1)
    gr = 1.0 + nrm(ks[14], (C_OUT,), 0.1)
    ber = nrm(ks[15], (C_OUT,), 0.1)
    mr = nrm(ks[16], (C_OUT,), 0.1)
    vr = 0.5 + jax.random.uniform(ks[17], (C_OUT,), jnp.float32)
    sr = gr / jnp.sqrt(vr + BN_EPS)
    hr = (br - mr) * sr + ber                  # conv bias folded through the BN

    return (w1, b1,
            s1.reshape(1, C_OUT), h1.reshape(1, C_OUT),
            wt, bt,
            s2.reshape(1, C_OUT), h2.reshape(1, C_OUT),
            wr, sr.reshape(1, C_OUT), hr.reshape(1, C_OUT))


def reference_nchw(x, A, params):
    """Pure-JAX reference mirroring the PyTorch forward in NCHW."""
    (w1, b1, s1, h1, wt, bt, s2, h2, wr, sr, hr) = params
    n_, cin, t_, v_ = x.shape
    # 1x1 conv -> (n, k, c, t, v)
    y = jnp.einsum('kic,nitv->nkctv', w1, x) + b1[:, 0, :][None, :, :, None, None]
    # einsum('nkctv,kvw->nctw')
    y = jnp.einsum('nkctv,kvw->nctw', y, A)
    y = y * s1.reshape(1, C_OUT, 1, 1) + h1.reshape(1, C_OUT, 1, 1)
    ypad = jnp.pad(y, ((0, 0), (0, 0), (PAD, PAD), (0, 0)))
    z = jnp.zeros((n_, C_OUT, t_, v_), jnp.float32) + bt.reshape(1, C_OUT, 1, 1)
    for dt in range(KT):
        z = z + jnp.einsum('io,nitv->notv', wt[dt], ypad[:, :, dt:dt + t_, :])
    z = jnp.where(z > 0, z, 0.2 * z)
    z = z * s2.reshape(1, C_OUT, 1, 1) + h2.reshape(1, C_OUT, 1, 1)
    res = jnp.einsum('io,nitv->notv', wr, x) * sr.reshape(1, C_OUT, 1, 1) \
          + hr.reshape(1, C_OUT, 1, 1)
    return jnp.maximum(z + res, 0.0)


if __name__ == "__main__":
    key = jax.random.PRNGKey(0)
    kx, ka, kp = jax.random.split(key, 3)
    x = jax.random.normal(kx, (N, C_IN, T, V), jnp.float32)   # NCHW, like PyTorch
    A = 0.3 * jax.random.normal(ka, (K, V, V), jnp.float32)
    params = init_params(kp)

    # one-time weight folding, hoisted out of the per-call path
    wbig, consts = jax.block_until_ready(pack_operands(A, params))

    out, A_out = st_gcn_forward(x, A, wbig, consts)
    out = jax.block_until_ready(out)

    ref = jnp.transpose(reference_nchw(x, A, params), (0, 2, 3, 1))  # -> (N, T, V, Cout)
    assert out.shape == (N, T, V, C_OUT)
    max_err = float(jnp.max(jnp.abs(out - ref)))
    assert jnp.allclose(out, ref, atol=2e-3, rtol=2e-3), f"max abs err {max_err}"
    print("KERNEL_OK")
</pallas_src>

<mosaic_0001>
module attributes {stable_mosaic.version = 11 : i64} {
  func.func @st_gcn_kernel(%arg0: i32, %arg1: memref<32x192xf32, #tpu.memory_space<vmem>>, %arg2: memref<192x256xf32, #tpu.memory_space<vmem>>, %arg3: memref<40x128xf32, #tpu.memory_space<vmem>>, %arg4: memref<32x128xf32, #tpu.memory_space<vmem>>) attributes {dimension_semantics = [#tpu.dimension_semantics<arbitrary>], iteration_bounds = array<i64: 1>, scalar_prefetch = 0 : i64, scratch_operands = 0 : i64, tpu.core_type = #tpu.core_type<tc>, window_params = [{pipeline_mode = #tpu.pipeline_mode<synchronous>, transform_indices = @transform_0, window_bounds = array<i64: 32, 192>}, {pipeline_mode = #tpu.pipeline_mode<synchronous>, transform_indices = @transform_1, window_bounds = array<i64: 192, 256>}, {pipeline_mode = #tpu.pipeline_mode<synchronous>, transform_indices = @transform_2, window_bounds = array<i64: 40, 128>}, {pipeline_mode = #tpu.pipeline_mode<synchronous>, transform_indices = @transform_3, window_bounds = array<i64: 32, 128>}]} {
    %c0 = arith.constant 0 : index
    %c0_0 = arith.constant 0 : index
    %0 = vector.load %arg1[%c0, %c0_0] : memref<32x192xf32, #tpu.memory_space<vmem>>, vector<32x192xf32>
    %c0_1 = arith.constant 0 : index
    %c0_2 = arith.constant 0 : index
    %1 = vector.load %arg2[%c0_1, %c0_2] : memref<192x256xf32, #tpu.memory_space<vmem>>, vector<192x256xf32>
    %cst = arith.constant dense<0.000000e+00> : vector<32x256xf32>
    %2 = tpu.matmul %0, %1, %cst {dimension_numbers = #tpu.dot_dimension_numbers<[1], [0], [0], [1], [0, 0, 1, 1], [], []>} : vector<32x192xf32>, vector<192x256xf32>, vector<32x256xf32> -> vector<32x256xf32>
    %3 = vector.extract_strided_slice %2 {offsets = [0, 0], sizes = [32, 128], strides = [1, 1]} : vector<32x256xf32> to vector<32x128xf32>
    %c0_3 = arith.constant 0 : index
    %c0_4 = arith.constant 0 : index
    %4 = vector.load %arg3[%c0_3, %c0_4] : memref<40x128xf32, #tpu.memory_space<vmem>>, vector<32x128xf32>
    %5 = arith.addf %3, %4 : vector<32x128xf32>
    %cst_5 = arith.constant 0.000000e+00 : f32
    %6 = vector.broadcast %cst_5 : f32 to vector<32x128xf32>
    %7 = arith.cmpf ogt, %5, %6 : vector<32x128xf32>
    %cst_6 = arith.constant 2.000000e-01 : f32
    %8 = vector.broadcast %cst_6 : f32 to vector<32x128xf32>
    %9 = arith.mulf %8, %5 : vector<32x128xf32>
    %10 = arith.select %7, %5, %9 : vector<32x128xi1>, vector<32x128xf32>
    %c32 = arith.constant 32 : index
    %c0_7 = arith.constant 0 : index
    %11 = vector.load %arg3[%c32, %c0_7] : memref<40x128xf32, #tpu.memory_space<vmem>>, vector<1x128xf32>
    %12 = vector.broadcast %11 : vector<1x128xf32> to vector<32x128xf32>
    %13 = arith.mulf %10, %12 : vector<32x128xf32>
    %c33 = arith.constant 33 : index
    %c0_8 = arith.constant 0 : index
    %14 = vector.load %arg3[%c33, %c0_8] : memref<40x128xf32, #tpu.memory_space<vmem>>, vector<1x128xf32>
    %15 = vector.broadcast %14 : vector<1x128xf32> to vector<32x128xf32>
    %16 = arith.addf %13, %15 : vector<32x128xf32>
    %17 = vector.extract_strided_slice %2 {offsets = [0, 128], sizes = [32, 128], strides = [1, 1]} : vector<32x256xf32> to vector<32x128xf32>
    %18 = arith.addf %16, %17 : vector<32x128xf32>
    %cst_9 = arith.constant 0.000000e+00 : f32
    %19 = vector.broadcast %cst_9 : f32 to vector<32x128xf32>
    %20 = arith.maximumf %18, %19 : vector<32x128xf32>
    %c0_10 = arith.constant 0 : index
    %c0_11 = arith.constant 0 : index
    %21 = vector.load %arg4[%c0_10, %c0_11] : memref<32x128xf32, #tpu.memory_space<vmem>>, vector<32x128xf32>
    tpu.vector_store %arg4[%c0_10, %c0_11], %20 {strides = array<i32>} : memref<32x128xf32, #tpu.memory_space<vmem>>, vector<32x128xf32>,
    return
  }
  func.func @transform_0(%arg0: i32) -> (i32, i32) {
    %c0_i32 = arith.constant 0 : i32
    %c0_i32_0 = arith.constant 0 : i32
    %c0_i32_1 = arith.constant 0 : i32
    return %c0_i32, %c0_i32_0 : i32, i32
  }
  func.func @transform_1(%arg0: i32) -> (i32, i32) {
    %c0_i32 = arith.constant 0 : i32
    %c0_i32_0 = arith.constant 0 : i32
    %c0_i32_1 = arith.constant 0 : i32
    return %c0_i32, %c0_i32_0 : i32, i32
  }
  func.func @transform_2(%arg0: i32) -> (i32, i32) {
    %c0_i32 = arith.constant 0 : i32
    %c0_i32_0 = arith.constant 0 : i32
    %c0_i32_1 = arith.constant 0 : i32
    return %c0_i32, %c0_i32_0 : i32, i32
  }
  func.func @transform_3(%arg0: i32) -> (i32, i32) {
    %c0_i32 = arith.constant 0 : i32
    %c0_i32_0 = arith.constant 0 : i32
    %c0_i32_1 = arith.constant 0 : i32
    return %c0_i32, %c0_i32_0 : i32, i32
  }
}

</mosaic_0001>

<llo_original>
// kernel: st_gcn_forward.1
$region0: #{st_gcn_forward.1}
  #allocation0 [shape = 'u32[]', space=smem, size = 0x4, offset = 0x4, fixed_abs, tag = 'smem constant byte address 0x4 - core index']
  #allocation1 [shape = 'u32[144,128]{1,0:T(1,128)}', space=vmem, size = 0x12000, scoped, tag = 'internal scratch']
  %s0 = inlined_call_operand.vmem [shape: f32[32,192], index: 0, kind: input, shape index: {}]
  %s1 = inlined_call_operand.vmem [shape: f32[192,256], index: 1, kind: input, shape index: {}]
  %s2 = inlined_call_operand.vmem [shape: f32[40,128], index: 2, kind: input, shape index: {}]
  %s3 = inlined_call_operand.vmem [shape: f32[32,128], index: 3, kind: output, shape index: {}]
  %s4 = sld [smem:[#allocation0]]
  $region22: #{st_gcn_forward.1} parent=0
    _
  %s6 = ssub.s32 1, %s4
  %s7 = scalar_select 0, %s6, %s4
  // Predicated region
  $region2: #{st_gcn_forward.1} parent=0 // pred_check
    _
  $region3: #{st_gcn_forward.1} parent=0 // pred_check_branch
    %9 = sbr.rel (0) target = $region5
  $region4: #{st_gcn_forward.1} parent=0 // pred_region
    _
  $region5: #{st_gcn_forward.1} parent=0 // pred_fallthru
    _
  // Predicated region
  $region6: #{st_gcn_forward.1} parent=0 // pred_check
    _
  $region7: #{st_gcn_forward.1} parent=0 // pred_check_branch
    %11 = sbr.rel (0) target = $region9
  $region8: #{st_gcn_forward.1} parent=0 // pred_region
    _
  $region9: #{st_gcn_forward.1} parent=0 // pred_fallthru
    _
  // Predicated region
  $region10: #{st_gcn_forward.1} parent=0 // pred_check
    _
  $region11: #{st_gcn_forward.1} parent=0 // pred_check_branch
    %13 = sbr.rel (0) target = $region13
  $region12: #{st_gcn_forward.1} parent=0 // pred_region
    _
  $region13: #{st_gcn_forward.1} parent=0 // pred_fallthru
    _
  %v14 = vld [vmem:[%s0] sm:$0xff]
  %v15 = vld [vmem:[%s0 + $0x8] sm:$0xff]
  %v16 = vld [vmem:[%s0 + $0x10] sm:$0xff]
  %v17 = vld [vmem:[%s0 + $0x18] sm:$0xff]
  %v18 = vld [vmem:[%s0 + $0x20] sm:$0xff]
  %v19 = vld [vmem:[%s0 + $0x28] sm:$0xff]
  %v20 = vld [vmem:[%s0 + $0x30] sm:$0xff]
  %v21 = vld [vmem:[%s0 + $0x38] sm:$0xff]
  %v22 = vld [vmem:[%s1] sm:$0xff]
  %v23 = vld [vmem:[%s1 + $0x8] sm:$0xff]
  %v24 = vld [vmem:[%s1 + $0x10] sm:$0xff]
  %v25 = vld [vmem:[%s1 + $0x18] sm:$0xff]
  %v26 = vld [vmem:[%s1 + $0x20] sm:$0xff]
  %v27 = vld [vmem:[%s1 + $0x28] sm:$0xff]
  %v28 = vld [vmem:[%s1 + $0x30] sm:$0xff]
  %v29 = vld [vmem:[%s1 + $0x38] sm:$0xff]
  %v30 = vld [vmem:[%s1 + $0x40] sm:$0xff]
  %v31 = vld [vmem:[%s1 + $0x48] sm:$0xff]
  %v32 = vld [vmem:[%s1 + $0x50] sm:$0xff]
  %v33 = vld [vmem:[%s1 + $0x58] sm:$0xff]
  %v34 = vld [vmem:[%s1 + $0x60] sm:$0xff]
  %v35 = vld [vmem:[%s1 + $0x68] sm:$0xff]
  %v36 = vld [vmem:[%s1 + $0x70] sm:$0xff]
  %v37 = vld [vmem:[%s1 + $0x78] sm:$0xff]
  %v38 = vld [vmem:[%s1 + $0x80] sm:$0xff]
  %v39 = vld [vmem:[%s1 + $0x88] sm:$0xff]
  %v40 = vld [vmem:[%s1 + $0x90] sm:$0xff]
  %v41 = vld [vmem:[%s1 + $0x98] sm:$0xff]
  %v42 = vld [vmem:[%s1 + $0xa0] sm:$0xff]
  %v43 = vld [vmem:[%s1 + $0xa8] sm:$0xff]
  %v44 = vld [vmem:[%s1 + $0xb0] sm:$0xff]
  %v45 = vld [vmem:[%s1 + $0xb8] sm:$0xff]
  %v46 = vld [vmem:[%s1 + $0xc0] sm:$0xff]
  %v47 = vld [vmem:[%s1 + $0xc8] sm:$0xff]
  %v48 = vld [vmem:[%s1 + $0xd0] sm:$0xff]
  %v49 = vld [vmem:[%s1 + $0xd8] sm:$0xff]
  %v50 = vld [vmem:[%s1 + $0xe0] sm:$0xff]
  %v51 = vld [vmem:[%s1 + $0xe8] sm:$0xff]
  %v52 = vld [vmem:[%s1 + $0xf0] sm:$0xff]
  %v53 = vld [vmem:[%s1 + $0xf8] sm:$0xff]
  %v54 = vld [vmem:[%s1 + $0x100] sm:$0xff]
  %v55 = vld [vmem:[%s1 + $0x108] sm:$0xff]
  %v56 = vld [vmem:[%s1 + $0x110] sm:$0xff]
  %v57 = vld [vmem:[%s1 + $0x118] sm:$0xff]
  %v58 = vld [vmem:[%s1 + $0x120] sm:$0xff]
  %v59 = vld [vmem:[%s1 + $0x128] sm:$0xff]
  %v60 = vld [vmem:[%s1 + $0x130] sm:$0xff]
  %v61 = vld [vmem:[%s1 + $0x138] sm:$0xff]
  %v62 = vld [vmem:[%s1 + $0x140] sm:$0xff]
  %v63 = vld [vmem:[%s1 + $0x148] sm:$0xff]
  %v64 = vld [vmem:[%s1 + $0x150] sm:$0xff]
  %v65 = vld [vmem:[%s1 + $0x158] sm:$0xff]
  %v66 = vld [vmem:[%s1 + $0x160] sm:$0xff]
  %v67 = vld [vmem:[%s1 + $0x168] sm:$0xff]
  %v68 = vld [vmem:[%s1 + $0x170] sm:$0xff]
  %v69 = vld [vmem:[%s1 + $0x178] sm:$0xff]
  %vm70 = vcmask 523264
  %v72 = vsel %vm70, %v15, 0
  %v75 = vsel %vm70, %v17, 0
  %v78 = vsel %vm70, %v19, 0
  %v81 = vsel %vm70, %v21, 0
  %83 = vmatprep.subr.mxu0 %v23
  %84 = vmatpush1.msra.mxu0 %v22
  %85 = vmatprep.subr.mxu0 %v25
  %86 = vmatpush1.msra.mxu0 %v24
  %87 = vmatprep.subr.mxu0 %v27
  %88 = vmatpush1.msra.mxu0 %v26
  %89 = vmatprep.subr.mxu0 %v29
  %90 = vmatpush1.msra.mxu0 %v28
  %91 = vmatprep.subr.mxu0 %v31
  %92 = vmatpush1.msra.mxu0 %v30
  %93 = vmatprep.subr.mxu0 %v33
  %94 = vmatpush1.msra.mxu0 %v32
  %95 = vmatprep.subr.mxu0 %v35
  %96 = vmatpush1.msra.mxu0 %v34
  %97 = vmatprep.subr.mxu0 %v37
  %98 = vmatpush1.msra.mxu0 %v36
  %99 = vmatprep.subr.mxu0 %v39
  %100 = vmatpush1.msra.mxu0 %v38
  %101 = vmatprep.subr.mxu0 %v41
  %102 = vmatpush1.msra.mxu0 %v40
  %103 = vmatprep.subr.mxu0 %v43
  %104 = vmatpush1.msra.mxu0 %v42
  %105 = vmatprep.subr.mxu0 %v45
  %106 = vmatpush1.msra.mxu0 %v44
  %107 = vmatprep.subr.mxu0 %v47
  %108 = vmatpush1.msra.mxu0 %v46
  %109 = vmatprep.subr.mxu0 %v49
  %110 = vmatpush1.msra.mxu0 %v48
  %111 = vmatprep.subr.mxu0 %v51
  %112 = vmatpush1.msra.mxu0 %v50
  %113 = vmatprep.subr.mxu0 %v53
  %114 = vmatpush1.msra.mxu0 %v52
  %115 = vmatprep.subr.mxu0 %v55
  %116 = vmatpush1.msra.mxu0 %v54
  %117 = vmatprep.subr.mxu0 %v57
  %118 = vmatpush1.msra.mxu0 %v56
  %119 = vmatprep.subr.mxu0 %v59
  %120 = vmatpush1.msra.mxu0 %v58
  %121 = vmatprep.subr.mxu0 %v61
  %122 = vmatpush1.msra.mxu0 %v60
  %123 = vmatprep.subr.mxu0 %v63
  %124 = vmatpush1.msra.mxu0 %v62
  %125 = vmatprep.subr.mxu0 %v65
  %126 = vmatpush1.msra.mxu0 %v64
  %127 = vmatprep.subr.mxu0 %v67
  %128 = vmatpush1.msra.mxu0 %v66
  %129 = vmatprep.subr.mxu0 %v69
  %130 = vmatpush1.msra.mxu0 %v68
  %131 = vmatprep.subr.mxu0 0.0
  %132 = vmatpush1.msra.mxu0 0.0
  %133 = vmatprep.subr.mxu0 0.0
  %134 = vmatpush1.msra.mxu0 0.0
  %135 = vmatprep.subr.mxu0 0.0
  %136 = vmatpush1.msra.mxu0 0.0
  %137 = vmatprep.subr.mxu0 0.0
  %138 = vmatpush1.msra.mxu0 0.0
  %139 = vmatprep.subr.mxu0 0.0
  %140 = vmatpush1.msra.mxu0 0.0
  %141 = vmatprep.subr.mxu0 0.0
  %142 = vmatpush1.msra.mxu0 0.0
  %143 = vmatprep.subr.mxu0 0.0
  %144 = vmatpush1.msra.mxu0 0.0
  %145 = vmatprep.subr.mxu0 0.0
  %146 = vmatpush1.msra.mxu0 0.0
  %147 = vmatprep.mubr.f32.mxu0 %v72
  %148 = vmatmul.mubr.f32.gmra.mrb[0].mxu0 %v14
  %v149 = vpop.f32.mrb[0].mxu0
  %v150 = vadd.f32 0.0, %v149
  %v151 = vpop.f32.mrb[0].mxu0
  %v152 = vadd.f32 0.0, %v151
  %153 = vmatprep.mubr.f32.mxu0 %v75
  %154 = vmatmul.mubr.f32.gmra.mrb[0].mxu0 %v16
  %v155 = vpop.f32.mrb[0].mxu0
  %v156 = vadd.f32 0.0, %v155
  %v157 = vpop.f32.mrb[0].mxu0
  %v158 = vadd.f32 0.0, %v157
  %159 = vmatprep.mubr.f32.mxu0 %v78
  %160 = vmatmul.mubr.f32.gmra.mrb[0].mxu0 %v18
  %v161 = vpop.f32.mrb[0].mxu0
  %v162 = vadd.f32 0.0, %v161
  %v163 = vpop.f32.mrb[0].mxu0
  %v164 = vadd.f32 0.0, %v163
  %165 = vmatprep.mubr.f32.mxu0 %v81
  %166 = vmatmul.mubr.f32.gmra.mrb[0].mxu0 %v20
  %v167 = vpop.f32.mrb[0].mxu0
  %v168 = vadd.f32 0.0, %v167
  %v169 = vpop.f32.mrb[0].mxu0
  %v170 = vadd.f32 0.0, %v169
  %171 = vdwg.mxu0
  %v172 = vld [vmem:[%s2] sm:$0xff]
  %v173 = vld [vmem:[%s2 + $0x8] sm:$0xff]
  %v174 = vld [vmem:[%s2 + $0x10] sm:$0xff]
  %v175 = vld [vmem:[%s2 + $0x18] sm:$0xff]
  %v176 = vadd.f32 %v150, %v172
  %v177 = vadd.f32 %v156, %v173
  %v178 = vadd.f32 %v162, %v174
  %v179 = vadd.f32 %v168, %v175
  %vm180 = vcmp.gt.f32.partialorder %v176, 0.0
  %vm181 = vcmp.gt.f32.partialorder %v177, 0.0
  %vm182 = vcmp.gt.f32.partialorder %v178, 0.0
  %vm183 = vcmp.gt.f32.partialorder %v179, 0.0
  %v184 = vmul.f32 %v176, 0.2
  %v185 = vmul.f32 %v177, 0.2
  %v186 = vmul.f32 %v178, 0.2
  %v187 = vmul.f32 %v179, 0.2
  %v188 = vsel %vm180, %v176, %v184
  %v189 = vsel %vm181, %v177, %v185
  %v190 = vsel %vm182, %v178, %v186
  %v191 = vsel %vm183, %v179, %v187
  %v192 = vld [vmem:[%s2 + $0x20] sm:$0x1]
  %v193 = vlaneseq
  %v194 = vshrl.u32 %v193, 7
  %v195 = vsub.s32 0, %v194
  %v196 = vrot.slane %v192, %v195
  %v197 = vmul.f32 %v188, %v196
  %v198 = vmul.f32 %v189, %v196
  %v199 = vmul.f32 %v190, %v196
  %v200 = vmul.f32 %v191, %v196
  %v201 = vld [vmem:[%s2 + $0x21] sm:$0x1]
  %v202 = vlaneseq
  %v203 = vshrl.u32 %v202, 7
  %v204 = vsub.s32 0, %v203
  %v205 = vrot.slane %v201, %v204
  %v206 = vadd.f32 %v197, %v205
  %v207 = vadd.f32 %v198, %v205
  %v208 = vadd.f32 %v199, %v205
  %v209 = vadd.f32 %v200, %v205
  %v210 = vadd.f32 %v206, %v152
  %v211 = vadd.f32 %v207, %v158
  %v212 = vadd.f32 %v208, %v164
  %v213 = vadd.f32 %v209, %v170
  %v214 = vmax.f32 %v210, 0.0
  %v215 = vmax.f32 %v211, 0.0
  %v216 = vmax.f32 %v212, 0.0
  %v217 = vmax.f32 %v213, 0.0
  %218 = vst [vmem:[%s3] sm:$0xff] %v214
  %219 = vst [vmem:[%s3 + $0x8] sm:$0xff] %v215
  %220 = vst [vmem:[%s3 + $0x10] sm:$0xff] %v216
  %221 = vst [vmem:[%s3 + $0x18] sm:$0xff] %v217
  // Predicated region
  $region14: #{st_gcn_forward.1} parent=0 // pred_check
    _
  $region15: #{st_gcn_forward.1} parent=0 // pred_check_branch
    %223 = sbr.rel (0) target = $region17
  $region16: #{st_gcn_forward.1} parent=0 // pred_region
    _
  $region17: #{st_gcn_forward.1} parent=0 // pred_fallthru
    _
  // Predicated region
  $region18: #{st_gcn_forward.1} parent=0 // pred_check
    _
  $region19: #{st_gcn_forward.1} parent=0 // pred_check_branch
    %225 = sbr.rel (0) target = $region21
  $region20: #{st_gcn_forward.1} parent=0 // pred_region
    _
  $region21: #{st_gcn_forward.1} parent=0 // pred_fallthru
    _

</llo_original>
